<compile_context>
chip_gen: v7x
topology: tpu7x:2x2x1
jax: 0.10.0
libtpu: 0.0.40
codegen_flags: <defaults>
</compile_context>

<pallas_src>
import functools

import jax
import jax.numpy as jnp
from jax.experimental import pallas as pl
from jax.experimental.pallas import tpu as pltpu

D_MODEL = 512     # matches the reference file's d_model = 512
EPS = 1e-6


def _layer_norm_kernel(x_ref, alpha_ref, beta_ref, o_ref, *, eps, inv_d, inv_dm1):
    """LayerNorm over the last (feature) axis of a (rows, D) tile."""
    x = x_ref[...].astype(jnp.float32)                # cast in VMEM, free under DMA
    mean = jnp.sum(x, axis=-1, keepdims=True) * inv_d
    xc = x - mean
    # Unbiased variance (torch .std default), two-pass for numerical safety.
    var = jnp.sum(xc * xc, axis=-1, keepdims=True) * inv_dm1
    inv = 1.0 / (jnp.sqrt(var) + eps)                 # exact; per-row scalar -> cheap
    y = alpha_ref[...] * (xc * inv) + beta_ref[...]
    o_ref[...] = y.astype(o_ref.dtype)


def _vmem_capacity_bytes():
    try:
        return int(pltpu.get_tpu_info().vmem_capacity_bytes)
    except Exception:
        return 64 << 20   # conservative fallback (v7x per-TC VMEM)


def layer_norm(x, alpha, beta, *, eps=EPS):
    """alpha * (x - mean) / (std_unbiased + eps) + beta along the last axis."""
    orig_shape = x.shape
    d = orig_shape[-1]
    x2 = x.reshape(-1, d)                             # no dtype change, no HBM copy
    rows = x2.shape[0]
    itemsize = x2.dtype.itemsize                      # in-dtype == out-dtype

    # --- pick a row block from the chip's VMEM budget ---------------------
    vmem_cap = _vmem_capacity_bytes()
    # use ~1/4 of physical VMEM for the pipeline (in+out, double-buffered)
    vmem_budget = min(vmem_cap, 128 << 20) // 4
    bytes_per_row = 2 * d * (itemsize + itemsize)     # 2x = double buffering
    max_block_rows = max(8, min(4096, (vmem_budget // bytes_per_row) // 8 * 8))

    if rows >= 256:
        # Split into >=2 grid steps so both TensorCores get work on v7x; the
        # extra ~0.35us grid step is noise on 1-TC chips at this size.
        split_rows = ((-(-rows // 2)) + 7) // 8 * 8   # round_up(cdiv(rows, 2), 8)
        block_rows = min(max_block_rows, split_rows)
    else:
        block_rows = min(max_block_rows, rows)        # full-extent block, no pad needed

    grid = (pl.cdiv(rows, block_rows),)               # ragged last block is masked

    footprint = 2 * block_rows * d * (itemsize + itemsize)
    vmem_limit = min(vmem_cap - (4 << 20), footprint + (16 << 20))

    kernel = functools.partial(
        _layer_norm_kernel, eps=eps, inv_d=1.0 / d, inv_dm1=1.0 / (d - 1))

    out = pl.pallas_call(
        kernel,
        out_shape=jax.ShapeDtypeStruct((rows, d), x2.dtype),
        grid=grid,
        in_specs=[
            pl.BlockSpec((block_rows, d), lambda i: (i, 0)),
            pl.BlockSpec((1, d), lambda i: (0, 0)),
            pl.BlockSpec((1, d), lambda i: (0, 0)),
        ],
        out_specs=pl.BlockSpec((block_rows, d), lambda i: (i, 0)),
        compiler_params=pltpu.CompilerParams(
            dimension_semantics=("parallel",),        # rows are independent
            vmem_limit_bytes=int(vmem_limit)),
    )(x2,
      alpha.reshape(1, d).astype(jnp.float32),
      beta.reshape(1, d).astype(jnp.float32))

    return out.reshape(orig_shape)


def layer_norm_ref(x, alpha, beta, eps=EPS):
    """Pure-JAX reference matching the torch module (unbiased std, eps on std)."""
    xf = x.astype(jnp.float32)
    mean = jnp.mean(xf, axis=-1, keepdims=True)
    var = jnp.sum((xf - mean) ** 2, axis=-1, keepdims=True) / (x.shape[-1] - 1)
    return alpha * (xf - mean) / (jnp.sqrt(var) + eps) + beta


if __name__ == "__main__":
    B, S = 2, 8
    key = jax.random.PRNGKey(0)
    kx, ka, kb = jax.random.split(key, 3)

    x = jax.random.normal(kx, (B, S, D_MODEL), jnp.float32)
    # Module init is alpha=ones, beta=zeros; perturb so both params are exercised.
    alpha = 1.0 + 0.1 * jax.random.normal(ka, (D_MODEL,), jnp.float32)
    beta = 0.1 * jax.random.normal(kb, (D_MODEL,), jnp.float32)

    # f32 path (torch default dtype) -- tight tolerance, exact division inside.
    out = layer_norm(x, alpha, beta)
    jax.block_until_ready(out)
    ref = layer_norm_ref(x, alpha, beta)
    assert out.shape == (B, S, D_MODEL) and out.dtype == jnp.float32
    assert bool(jnp.all(jnp.isfinite(out)))
    assert bool(jnp.allclose(out, ref, rtol=1e-4, atol=1e-4)), \
        float(jnp.max(jnp.abs(out - ref)))

    # bf16 I/O path (the production case): I/O in bf16, math in f32 inside.
    x_bf16 = x.astype(jnp.bfloat16)
    out_bf16 = layer_norm(x_bf16, alpha, beta)
    jax.block_until_ready(out_bf16)
    ref_bf16 = layer_norm_ref(x_bf16, alpha, beta)
    assert out_bf16.dtype == jnp.bfloat16
    assert bool(jnp.all(jnp.isfinite(out_bf16.astype(jnp.float32))))
    assert bool(jnp.allclose(out_bf16.astype(jnp.float32), ref_bf16,
                             rtol=2e-2, atol=2e-2))

    print("KERNEL_OK")
</pallas_src>

<mosaic_0001>
module attributes {stable_mosaic.version = 11 : i64} {
  func.func @_layer_norm_kernel(%arg0: i32, %arg1: memref<16x512xf32, #tpu.memory_space<vmem>>, %arg2: memref<1x512xf32, #tpu.memory_space<vmem>>, %arg3: memref<1x512xf32, #tpu.memory_space<vmem>>, %arg4: memref<16x512xf32, #tpu.memory_space<vmem>>) attributes {dimension_semantics = [#tpu.dimension_semantics<parallel>], iteration_bounds = array<i64: 1>, scalar_prefetch = 0 : i64, scratch_operands = 0 : i64, tpu.core_type = #tpu.core_type<tc>, window_params = [{transform_indices = @transform_0, window_bounds = array<i64: 16, 512>}, {pipeline_mode = #tpu.pipeline_mode<synchronous>, transform_indices = @transform_1, window_bounds = array<i64: 1, 512>}, {pipeline_mode = #tpu.pipeline_mode<synchronous>, transform_indices = @transform_2, window_bounds = array<i64: 1, 512>}, {transform_indices = @transform_3, window_bounds = array<i64: 16, 512>}]} {
    %c0 = arith.constant 0 : index
    %c0_0 = arith.constant 0 : index
    %0 = vector.load %arg1[%c0, %c0_0] : memref<16x512xf32, #tpu.memory_space<vmem>>, vector<16x512xf32>
    %cst = arith.constant dense<0.000000e+00> : vector<16xf32>
    %1 = vector.multi_reduction <add>, %0, %cst [1] : vector<16x512xf32> to vector<16xf32>
    %2 = vector.shape_cast %1 : vector<16xf32> to vector<16x1xf32>
    %cst_1 = arith.constant 0.001953125 : f32
    %3 = vector.broadcast %cst_1 : f32 to vector<16x1xf32>
    %4 = arith.mulf %2, %3 : vector<16x1xf32>
    %5 = vector.broadcast %4 : vector<16x1xf32> to vector<16x512xf32>
    %6 = arith.subf %0, %5 : vector<16x512xf32>
    %7 = arith.mulf %6, %6 : vector<16x512xf32>
    %cst_2 = arith.constant dense<0.000000e+00> : vector<16xf32>
    %8 = vector.multi_reduction <add>, %7, %cst_2 [1] : vector<16x512xf32> to vector<16xf32>
    %9 = vector.shape_cast %8 : vector<16xf32> to vector<16x1xf32>
    %cst_3 = arith.constant 0.00195694715 : f32
    %10 = vector.broadcast %cst_3 : f32 to vector<16x1xf32>
    %11 = arith.mulf %9, %10 : vector<16x1xf32>
    %12 = math.sqrt %11 : vector<16x1xf32>
    %cst_4 = arith.constant 9.99999997E-7 : f32
    %13 = vector.broadcast %cst_4 : f32 to vector<16x1xf32>
    %14 = arith.addf %12, %13 : vector<16x1xf32>
    %cst_5 = arith.constant 1.000000e+00 : f32
    %15 = vector.broadcast %cst_5 : f32 to vector<16x1xf32>
    %16 = arith.divf %15, %14 : vector<16x1xf32>
    %c0_6 = arith.constant 0 : index
    %c0_7 = arith.constant 0 : index
    %17 = vector.load %arg2[%c0_6, %c0_7] : memref<1x512xf32, #tpu.memory_space<vmem>>, vector<1x512xf32>
    %18 = vector.broadcast %16 : vector<16x1xf32> to vector<16x512xf32>
    %19 = arith.mulf %6, %18 : vector<16x512xf32>
    %20 = vector.broadcast %17 : vector<1x512xf32> to vector<16x512xf32>
    %21 = arith.mulf %20, %19 : vector<16x512xf32>
    %c0_8 = arith.constant 0 : index
    %c0_9 = arith.constant 0 : index
    %22 = vector.load %arg3[%c0_8, %c0_9] : memref<1x512xf32, #tpu.memory_space<vmem>>, vector<1x512xf32>
    %23 = vector.broadcast %22 : vector<1x512xf32> to vector<16x512xf32>
    %24 = arith.addf %21, %23 : vector<16x512xf32>
    %c0_10 = arith.constant 0 : index
    %c0_11 = arith.constant 0 : index
    %25 = vector.load %arg4[%c0_10, %c0_11] : memref<16x512xf32, #tpu.memory_space<vmem>>, vector<16x512xf32>
    tpu.vector_store %arg4[%c0_10, %c0_11], %24 {strides = array<i32>} : memref<16x512xf32, #tpu.memory_space<vmem>>, vector<16x512xf32>,
    return
  }
  func.func @transform_0(%arg0: i32) -> (i32, i32) {
    %c0_i32 = arith.constant 0 : i32
    %c0_i32_0 = arith.constant 0 : i32
    return %arg0, %c0_i32 : i32, i32
  }
  func.func @transform_1(%arg0: i32) -> (i32, i32) {
    %c0_i32 = arith.constant 0 : i32
    %c0_i32_0 = arith.constant 0 : i32
    %c0_i32_1 = arith.constant 0 : i32
    return %c0_i32, %c0_i32_0 : i32, i32
  }
  func.func @transform_2(%arg0: i32) -> (i32, i32) {
    %c0_i32 = arith.constant 0 : i32
    %c0_i32_0 = arith.constant 0 : i32
    %c0_i32_1 = arith.constant 0 : i32
    return %c0_i32, %c0_i32_0 : i32, i32
  }
  func.func @transform_3(%arg0: i32) -> (i32, i32) {
    %c0_i32 = arith.constant 0 : i32
    %c0_i32_0 = arith.constant 0 : i32
    return %arg0, %c0_i32 : i32, i32
  }
}

</mosaic_0001>

<llo_original>
// kernel: tpu_custom_call.1
$region0: #{tpu_custom_call.1}
  #allocation0 [shape = 'u32[]', space=smem, size = 0x4, offset = 0x4, fixed_abs, tag = 'smem constant byte address 0x4 - core index']
  #allocation1 [shape = 'u32[144,128]{1,0:T(1,128)}', space=vmem, size = 0x12000, scoped, tag = 'internal scratch']
  %s0 = inlined_call_operand.hbm [shape: f32[16,512], index: 0, kind: input, shape index: {}]
  %s1 = inlined_call_operand.hbm [shape: f32[1,512], index: 1, kind: input, shape index: {}]
  %s2 = inlined_call_operand.vmem [shape: f32[1,512], index: 2, kind: input, shape index: {}]
  %s3 = inlined_call_operand.hbm [shape: f32[16,512], index: 3, kind: output, shape index: {}]
  %s4 = sld [smem:[#allocation0]]
  $region30: #{tpu_custom_call.1} parent=0
    _
  %s6 = ssub.s32 1, %s4
  %s7 = scalar_select 0, %s6, %s4
  $region1: #{tpu_custom_call.1} parent=0
    #allocation2 [shape = 'u8[32768]{0}', space=vmem, size = 0x8000, scoped, tag = 'input window, operand 0, single buffered']
    #allocation3 [shape = 's32[1]{0}', space=sflag, size = 0x4, scoped, tag = 'scoped memory for tpu_custom_call.1']
    #allocation4 [shape = 's32[1]{0}', space=sflag, size = 0x4, scoped, tag = 'scoped memory for tpu_custom_call.1']
    #allocation5 [shape = 'u8[2048]{0}', space=vmem, size = 0x800, scoped, tag = 'input window, operand 1, single buffered']
    #allocation6 [shape = 's32[1]{0}', space=sflag, size = 0x4, scoped, tag = 'scoped memory for tpu_custom_call.1']
    #allocation7 [shape = 'u8[32768]{0}', space=vmem, size = 0x8000, scoped, tag = 'output window, operand 0, single buffered']
    %8 = vsyncpa [#allocation3], 0
    %9 = vsyncpa [#allocation6], 0
    %10 = vsyncpa [#allocation4], 0
    // Predicated region
    $region2: #{tpu_custom_call.1} parent=1 // pred_check
      _
    $region3: #{tpu_custom_call.1} parent=1 // pred_check_branch
      %12 = sbr.rel (0) target = $region5
    $region4: #{tpu_custom_call.1} parent=1 // pred_region
      %s14 = ssub.s32 1024, 1024
      %15 = vsyncadd [#allocation3], %s14
      %s16 = sshll.u32 [#allocation2], 4
      %s17 = int_to_ptr.vmem [resolvable:$true] %s16
      %22 = dma.hbm_to_vmem [thread:$0]  %s0, 1024, %s17, [#allocation3], 512, 512, 32
    $region5: #{tpu_custom_call.1} parent=1 // pred_fallthru
      _
    // Predicated region
    $region6: #{tpu_custom_call.1} parent=1 // pred_check
      _
    $region7: #{tpu_custom_call.1} parent=1 // pred_check_branch
      %24 = sbr.rel (0) target = $region9
    $region8: #{tpu_custom_call.1} parent=1 // pred_region
      %s26 = ssub.s32 64, 64
      %27 = vsyncadd [#allocation6], %s26
      %s29 = sshll.u32 [#allocation5], 4
      %s30 = int_to_ptr.vmem [resolvable:$true] %s29
      %32 = dma.hbm_to_vmem [thread:$0]  %s1, 64, %s30, [#allocation6]
    $region9: #{tpu_custom_call.1} parent=1 // pred_fallthru
      _
    // Predicated region
    $region10: #{tpu_custom_call.1} parent=1 // pred_check
      _
    $region11: #{tpu_custom_call.1} parent=1 // pred_check_branch
      %34 = sbr.rel (0) target = $region13
    $region12: #{tpu_custom_call.1} parent=1 // pred_region
      _
    $region13: #{tpu_custom_call.1} parent=1 // pred_fallthru
      _
    // Predicated region
    $region14: #{tpu_custom_call.1} parent=1 // pred_check
      _
    $region15: #{tpu_custom_call.1} parent=1 // pred_check_branch
      %36 = sbr.rel (0) target = $region17
    $region16: #{tpu_custom_call.1} parent=1 // pred_region
      %37 = dma.done [#allocation3], 1024
    $region17: #{tpu_custom_call.1} parent=1 // pred_fallthru
      _
    // Predicated region
    $region18: #{tpu_custom_call.1} parent=1 // pred_check
      _
    $region19: #{tpu_custom_call.1} parent=1 // pred_check_branch
      %39 = sbr.rel (0) target = $region21
    $region20: #{tpu_custom_call.1} parent=1 // pred_region
      %40 = dma.done [#allocation6], 64
    $region21: #{tpu_custom_call.1} parent=1 // pred_fallthru
      _
    %v41 = vld [vmem:[#allocation2] sm:$0xff]
    %v42 = vld [vmem:[#allocation2 + $0x8] sm:$0xff]
    %v43 = vld [vmem:[#allocation2 + $0x10] sm:$0xff]
    %v44 = vld [vmem:[#allocation2 + $0x18] sm:$0xff]
    %v45 = vld [vmem:[#allocation2 + $0x20] sm:$0xff]
    %v46 = vld [vmem:[#allocation2 + $0x28] sm:$0xff]
    %v47 = vld [vmem:[#allocation2 + $0x30] sm:$0xff]
    %v48 = vld [vmem:[#allocation2 + $0x38] sm:$0xff]
    %v49 = vadd.f32 %v41, %v42
    %v50 = vadd.f32 %v49, %v43
    %v51 = vadd.f32 %v50, %v44
    %52 = vadd.xlane.f32.xlu0 %v51
    %v53 = vpop.xlane.xlu0 %52
    %v54 = vadd.f32 %v45, %v46
    %v55 = vadd.f32 %v54, %v47
    %v56 = vadd.f32 %v55, %v48
    %57 = vadd.xlane.f32.xlu0 %v56
    %v58 = vpop.xlane.xlu0 %57
    %v59 = vmul.f32 %v53, 0.001953125
    %v60 = vmul.f32 %v58, 0.001953125
    %v61 = vsub.f32 %v41, %v59
    %v62 = vsub.f32 %v42, %v59
    %v63 = vsub.f32 %v43, %v59
    %v64 = vsub.f32 %v44, %v59
    %v65 = vsub.f32 %v45, %v60
    %v66 = vsub.f32 %v46, %v60
    %v67 = vsub.f32 %v47, %v60
    %v68 = vsub.f32 %v48, %v60
    %v69 = vmul.f32 %v61, %v61
    %v70 = vmul.f32 %v62, %v62
    %v71 = vmul.f32 %v63, %v63
    %v72 = vmul.f32 %v64, %v64
    %v73 = vmul.f32 %v65, %v65
    %v74 = vmul.f32 %v66, %v66
    %v75 = vmul.f32 %v67, %v67
    %v76 = vmul.f32 %v68, %v68
    %v77 = vadd.f32 %v69, %v70
    %v78 = vadd.f32 %v77, %v71
    %v79 = vadd.f32 %v78, %v72
    %80 = vadd.xlane.f32.xlu0 %v79
    %v81 = vpop.xlane.xlu0 %80
    %v82 = vadd.f32 %v73, %v74
    %v83 = vadd.f32 %v82, %v75
    %v84 = vadd.f32 %v83, %v76
    %85 = vadd.xlane.f32.xlu0 %v84
    %v86 = vpop.xlane.xlu0 %85
    %v87 = vmul.f32 %v81, 0.0019569471
    %v88 = vmul.f32 %v86, 0.0019569471
    %v89 = vrsqrt.pop %v87
    %v90 = vmul.f32 %v87, %v89
    %vm91 = vcmp.eq.f32.partialorder %v87, inf
    %v92 = vsel %vm91, %v87, %v90
    %vm93 = vcmp.eq.f32.partialorder %v87, 0.0
    %v94 = vand.u32 %v87, 2147483648
    %v95 = vsel %vm93, %v94, %v92
    %v96 = vrsqrt.pop %v88
    %v97 = vmul.f32 %v88, %v96
    %vm98 = vcmp.eq.f32.partialorder %v88, inf
    %v99 = vsel %vm98, %v88, %v97
    %vm100 = vcmp.eq.f32.partialorder %v88, 0.0
    %v101 = vand.u32 %v88, 2147483648
    %v102 = vsel %vm100, %v101, %v99
    %v103 = vadd.f32 %v95, 1e-06
    %v104 = vadd.f32 %v102, 1e-06
    %v105 = vrcp.pop %v103
    %v106 = vmul.f32 1.0, %v105
    %v107 = vrcp.pop %v104
    %v108 = vmul.f32 1.0, %v107
    %v109 = vld [vmem:[#allocation5] sm:$0xf]
    %v110 = vmul.f32 %v61, %v106
    %v111 = vmul.f32 %v62, %v106
    %v112 = vmul.f32 %v63, %v106
    %v113 = vmul.f32 %v64, %v106
    %v114 = vmul.f32 %v65, %v108
    %v115 = vmul.f32 %v66, %v108
    %v116 = vmul.f32 %v67, %v108
    %v117 = vmul.f32 %v68, %v108
    %v119 = vlaneseq
    %v120 = vshrl.u32 %v119, 7
    %v121 = vsub.s32 0, %v120
    %v122 = vrot.slane %v109, %v121
    %v123 = vlaneseq
    %v124 = vshrl.u32 %v123, 7
    %v125 = vsub.s32 1, %v124
    %v126 = vrot.slane %v109, %v125
    %v127 = vlaneseq
    %v128 = vshrl.u32 %v127, 7
    %v129 = vsub.s32 2, %v128
    %v130 = vrot.slane %v109, %v129
    %v131 = vlaneseq
    %v132 = vshrl.u32 %v131, 7
    %v133 = vsub.s32 3, %v132
    %v134 = vrot.slane %v109, %v133
    %v139 = vmul.f32 %v122, %v110
    %v140 = vmul.f32 %v126, %v111
    %v141 = vmul.f32 %v130, %v112
    %v142 = vmul.f32 %v134, %v113
    %v143 = vmul.f32 %v122, %v114
    %v144 = vmul.f32 %v126, %v115
    %v145 = vmul.f32 %v130, %v116
    %v146 = vmul.f32 %v134, %v117
    %v147 = vld [vmem:[%s2] sm:$0xf]
    %v149 = vlaneseq
    %v150 = vshrl.u32 %v149, 7
    %v151 = vsub.s32 0, %v150
    %v152 = vrot.slane %v147, %v151
    %v153 = vlaneseq
    %v154 = vshrl.u32 %v153, 7
    %v155 = vsub.s32 1, %v154
    %v156 = vrot.slane %v147, %v155
    %v157 = vlaneseq
    %v158 = vshrl.u32 %v157, 7
    %v159 = vsub.s32 2, %v158
    %v160 = vrot.slane %v147, %v159
    %v161 = vlaneseq
    %v162 = vshrl.u32 %v161, 7
    %v163 = vsub.s32 3, %v162
    %v164 = vrot.slane %v147, %v163
    %v169 = vadd.f32 %v139, %v152
    %v170 = vadd.f32 %v140, %v156
    %v171 = vadd.f32 %v141, %v160
    %v172 = vadd.f32 %v142, %v164
    %v173 = vadd.f32 %v143, %v152
    %v174 = vadd.f32 %v144, %v156
    %v175 = vadd.f32 %v145, %v160
    %v176 = vadd.f32 %v146, %v164
    %177 = vst [vmem:[#allocation7] sm:$0xff] %v169
    %178 = vst [vmem:[#allocation7 + $0x8] sm:$0xff] %v170
    %179 = vst [vmem:[#allocation7 + $0x10] sm:$0xff] %v171
    %180 = vst [vmem:[#allocation7 + $0x18] sm:$0xff] %v172
    %181 = vst [vmem:[#allocation7 + $0x20] sm:$0xff] %v173
    %182 = vst [vmem:[#allocation7 + $0x28] sm:$0xff] %v174
    %183 = vst [vmem:[#allocation7 + $0x30] sm:$0xff] %v175
    %184 = vst [vmem:[#allocation7 + $0x38] sm:$0xff] %v176
    // Predicated region
    $region22: #{tpu_custom_call.1} parent=1 // pred_check
      _
    $region23: #{tpu_custom_call.1} parent=1 // pred_check_branch
      %186 = sbr.rel (0) target = $region25
    $region24: #{tpu_custom_call.1} parent=1 // pred_region
      %s188 = ssub.s32 1024, 1024
      %189 = vsyncadd [#allocation4], %s188
      %s190 = sshll.u32 [#allocation7], 4
      %s191 = int_to_ptr.vmem [resolvable:$true] %s190
      %196 = dma.vmem_to_hbm [thread:$0]  %s191, 1024, %s3, [#allocation4], 512, 512, 32
    $region25: #{tpu_custom_call.1} parent=1 // pred_fallthru
      _
    // Predicated region
    $region26: #{tpu_custom_call.1} parent=1 // pred_check
      _
    $region27: #{tpu_custom_call.1} parent=1 // pred_check_branch
      %198 = sbr.rel (0) target = $region29
    $region28: #{tpu_custom_call.1} parent=1 // pred_region
      %199 = dma.done [#allocation4], 1024
    $region29: #{tpu_custom_call.1} parent=1 // pred_fallthru
      _
    %200 = vsyncpa [#allocation3], 1
    %201 = vsyncpa [#allocation6], 1
    %202 = vsyncpa [#allocation4], 1

</llo_original>
